<compile_context>
chip_gen: v6e
topology: v6e:2x2x1
jax: 0.10.0
libtpu: 0.0.40
codegen_flags: <defaults>
</compile_context>

<pallas_src>
import jax
import jax.numpy as jnp
from jax.experimental import pallas as pl
from jax.experimental.pallas import tpu as pltpu


# ----------------------------------------------------------------------------
# Pallas kernels
# ----------------------------------------------------------------------------
def conv_cosw_kernel(w_ref, p_ref, cw_ref, o_ref):
    """Feature-extractor hot path, lane-dense layout.

    w_ref : [Cout, K]      resident weight matrix (K = Cin*9)
    p_ref : [K, T]         im2col patch tile (T = HW lane tile)
    cw_ref: [1, T]         cos-window tile (broadcast over Cout rows)
    o_ref : [Cout, T]      output tile, written unmasked (T multiple of 128)
    """
    acc = jnp.dot(w_ref[...], p_ref[...], preferred_element_type=jnp.float32)
    o_ref[...] = acc * cw_ref[...]


def cf_corr_kernel(xr_ref, xi_ref, zr_ref, zi_ref, ar_ref, ai_ref,
                   out_re_ref, out_im_ref):
    """kxzf = sum_c complex_mulconj(xf, zf);  response_f = complex_mul(kxzf, alphaf).

    All refs are lane-dense over M = H*Wf:
      xr/xi : [C, M]   (one batch element; grid over B)
      zr/zi : [C, M]   resident template
      ar/ai : [1, M]   resident alphaf
      outs  : [1, M]
    """
    xr, xi = xr_ref[...], xi_ref[...]
    zr, zi = zr_ref[...], zi_ref[...]
    # complex_mulconj: real = xr*zr + xi*zi ; imag = xi*zr - xr*zi, summed over C
    kr = jnp.sum(xr * zr + xi * zi, axis=0, keepdims=True)   # [1, M]
    ki = jnp.sum(xi * zr - xr * zi, axis=0, keepdims=True)
    ar, ai = ar_ref[...], ai_ref[...]
    # complex_mul(kxzf, alphaf)
    out_re_ref[...] = kr * ar - ki * ai
    out_im_ref[...] = kr * ai + ki * ar


# ----------------------------------------------------------------------------
# Plain-JAX glue
# ----------------------------------------------------------------------------
def _im2col_3x3(x):
    """x: [B, Cin, H, W] -> [B, Cin*9, H*W] with 'same' zero padding."""
    B, Cin, H, W = x.shape
    xp = jnp.pad(x, ((0, 0), (0, 0), (1, 1), (1, 1)))
    cols = [xp[:, :, i:i + H, j:j + W] for i in range(3) for j in range(3)]
    p = jnp.stack(cols, axis=2)                    # [B, Cin, 9, H, W]
    return p.reshape(B, Cin * 9, H * W)            # no transpose needed


def _pick_lane_tile(n):
    """Largest 256/128-multiple tile that divides n (256-multiples preferred
    for the 2x256^2 MXUs on v6e/v7x); falls back to the full extent."""
    for t in (2048, 1024, 512, 256, 128):
        if n % t == 0:
            return t
    return n


def feature_extractor_pallas(x, conv_w, cos_window):
    """3x3 conv feature extractor (synthetic 'base') * cos_window, via Pallas.

    Returns NCHW [B, Cout, H, W] directly (output lane axis = H*W).
    """
    B, Cin, H, W = x.shape
    Cout = conv_w.shape[0]
    K = Cin * 9
    HW = H * W

    patches = _im2col_3x3(x)                       # [B, K, HW]
    wmat = conv_w.reshape(Cout, K)                 # [Cout, K]
    cw = cos_window.reshape(1, HW).astype(jnp.float32)

    # TODO(synk): at production DCFNet sizes, replace the host-side im2col with
    # an in-kernel 3x3 gather from a padded VMEM tile (and/or stream patches in
    # bf16) to cut the 9x HBM blow-up.
    T = _pick_lane_tile(HW)
    grid = (B, HW // T)

    cost = pl.CostEstimate(
        flops=2 * B * Cout * K * HW,
        transcendentals=0,
        bytes_accessed=4 * (B * K * HW + Cout * K + HW + B * Cout * HW),
    )

    out = pl.pallas_call(
        conv_cosw_kernel,
        grid=grid,
        out_shape=jax.ShapeDtypeStruct((B, Cout, HW), jnp.float32),
        in_specs=[
            pl.BlockSpec((Cout, K), lambda b, t: (0, 0)),                # resident weights
            pl.BlockSpec((pl.Squeezed(), K, T), lambda b, t: (b, 0, t)),  # patch tile
            pl.BlockSpec((1, T), lambda b, t: (0, t)),                    # cos-window tile
        ],
        out_specs=pl.BlockSpec((pl.Squeezed(), Cout, T), lambda b, t: (b, 0, t)),
        compiler_params=pltpu.CompilerParams(
            dimension_semantics=("parallel", "parallel")),
        cost_estimate=cost,
    )(wmat, patches, cw)

    return out.reshape(B, Cout, H, W)              # already NCHW, no transpose


def cf_response_freq(xf, zf, alphaf):
    """Frequency-domain correlation response via Pallas kernel (lane-dense)."""
    B, C, H, Wf = xf.shape
    M = H * Wf

    xr = jnp.real(xf).reshape(B, C, M)
    xi = jnp.imag(xf).reshape(B, C, M)
    zr = jnp.real(zf).reshape(C, M)
    zi = jnp.imag(zf).reshape(C, M)
    ar = jnp.real(alphaf).reshape(1, M)
    ai = jnp.imag(alphaf).reshape(1, M)

    out_re, out_im = pl.pallas_call(
        cf_corr_kernel,
        grid=(B,),
        out_shape=(jax.ShapeDtypeStruct((B, 1, M), jnp.float32),
                   jax.ShapeDtypeStruct((B, 1, M), jnp.float32)),
        in_specs=[
            pl.BlockSpec((pl.Squeezed(), C, M), lambda b: (b, 0, 0)),  # xf real
            pl.BlockSpec((pl.Squeezed(), C, M), lambda b: (b, 0, 0)),  # xf imag
            pl.BlockSpec((C, M), lambda b: (0, 0)),                    # zf real (resident)
            pl.BlockSpec((C, M), lambda b: (0, 0)),                    # zf imag (resident)
            pl.BlockSpec((1, M), lambda b: (0, 0)),                    # alphaf real (resident)
            pl.BlockSpec((1, M), lambda b: (0, 0)),                    # alphaf imag (resident)
        ],
        out_specs=(pl.BlockSpec((pl.Squeezed(), 1, M), lambda b: (b, 0, 0)),
                   pl.BlockSpec((pl.Squeezed(), 1, M), lambda b: (b, 0, 0))),
        compiler_params=pltpu.CompilerParams(dimension_semantics=("parallel",)),
    )(xr, xi, zr, zi, ar, ai)

    # TODO(synk): at production sizes (C~32, H=W~121) additionally grid over C
    # with a pl.when-guarded VMEM accumulator so xf tiles fit v7x's 64 MiB VMEM.
    return out_re.reshape(B, H, Wf) + 1j * out_im.reshape(B, H, Wf)


def cfnet_forward(x, params):
    """CFNet.forward:  feat*cos_window -> rfft2 -> sum_c(xf*conj(zf)) * alphaf -> ifft."""
    feat = feature_extractor_pallas(x, params["conv_w"], params["cos_window"])
    xf = jnp.fft.rfft2(feat, axes=(-2, -1))                    # [B, C, H, Wf]
    resp_f = cf_response_freq(xf, params["model_zf"], params["model_alphaf"])
    # TODO(synk): reference source applies `rfft` to the already-complex product
    # (apparent typo for irfft in the original DCFNet); irfft2 is used here.
    response = jnp.fft.irfft2(resp_f, s=feat.shape[-2:], axes=(-2, -1))
    return response[:, None, :, :]                             # keepdim channel -> [B,1,H,W]


def ref_forward(x, params):
    """Pure-JAX reference of the same forward (for correctness check)."""
    feat = jax.lax.conv_general_dilated(
        x, params["conv_w"], (1, 1), "SAME",
        dimension_numbers=("NCHW", "OIHW", "NCHW"))
    feat = feat * params["cos_window"][None, None]
    xf = jnp.fft.rfft2(feat, axes=(-2, -1))
    kxzf = jnp.sum(xf * jnp.conj(params["model_zf"])[None], axis=1)
    resp_f = kxzf * params["model_alphaf"][None]
    return jnp.fft.irfft2(resp_f, s=feat.shape[-2:], axes=(-2, -1))[:, None]


# ----------------------------------------------------------------------------
if __name__ == "__main__":
    key = jax.random.PRNGKey(0)
    B, Cin, Cout, H, W = 2, 4, 8, 16, 16
    k1, k2, k3 = jax.random.split(key, 3)

    x = jax.random.normal(k1, (B, Cin, H, W), jnp.float32)
    conv_w = 0.1 * jax.random.normal(k2, (Cout, Cin, 3, 3), jnp.float32)

    hann = lambda n: (0.5 - 0.5 * jnp.cos(2 * jnp.pi * jnp.arange(n) / n)).astype(jnp.float32)
    cos_window = jnp.outer(hann(H), hann(W)).astype(jnp.float32)

    # --- deterministic "update()" to build model_zf / model_alphaf ---
    z = jax.random.normal(k3, (1, Cin, H, W), jnp.float32)
    zfeat = feature_extractor_pallas(z, conv_w, cos_window)
    zf = jnp.fft.rfft2(zfeat, axes=(-2, -1))[0]                # [C, H, Wf]
    kzzf = jnp.sum(jnp.abs(zf) ** 2, axis=0)                   # sum over re/im + channels
    yy, xx = jnp.meshgrid(jnp.arange(H), jnp.arange(W), indexing="ij")
    g = jnp.exp(-0.5 * (((yy - H // 2) ** 2 + (xx - W // 2) ** 2) / 2.0 ** 2))
    g = jnp.roll(g, (-(H // 2), -(W // 2)), axis=(0, 1)).astype(jnp.float32)
    yf = jnp.fft.rfft2(g)                                      # config.yf
    lambda0 = 1e-4
    alphaf = yf / (kzzf + lambda0)

    params = dict(conv_w=conv_w, cos_window=cos_window,
                  model_zf=zf, model_alphaf=alphaf)

    response = jax.block_until_ready(cfnet_forward(x, params))
    assert response.shape == (B, 1, H, W), response.shape

    ref = jax.block_until_ready(ref_forward(x, params))
    assert jnp.allclose(response, ref, atol=1e-3, rtol=1e-3), \
        float(jnp.max(jnp.abs(response - ref)))

    print("KERNEL_OK")
</pallas_src>

<mosaic_0001>
module attributes {stable_mosaic.version = 11 : i64} {
  func.func @conv_cosw_kernel(%arg0: i32, %arg1: i32, %arg2: memref<8x36xf32, #tpu.memory_space<vmem>>, %arg3: memref<1x36x256xf32, #tpu.memory_space<vmem>>, %arg4: memref<1x256xf32, #tpu.memory_space<vmem>>, %arg5: memref<1x8x256xf32, #tpu.memory_space<vmem>>) attributes {dimension_semantics = [#tpu.dimension_semantics<parallel>, #tpu.dimension_semantics<parallel>], iteration_bounds = array<i64: 1, 1>, scalar_prefetch = 0 : i64, scratch_operands = 0 : i64, tpu.core_type = #tpu.core_type<tc>, window_params = [{pipeline_mode = #tpu.pipeline_mode<synchronous>, transform_indices = @transform_0, window_bounds = array<i64: 8, 36>}, {transform_indices = @transform_1, window_bounds = array<i64: 1, 36, 256>}, {transform_indices = @transform_2, window_bounds = array<i64: 1, 256>}, {transform_indices = @transform_3, window_bounds = array<i64: 1, 8, 256>}]} {
    %c0 = arith.constant 0 : index
    %c0_0 = arith.constant 0 : index
    %0 = vector.load %arg2[%c0, %c0_0] : memref<8x36xf32, #tpu.memory_space<vmem>>, vector<8x36xf32>
    %c0_1 = arith.constant 0 : index
    %c0_2 = arith.constant 0 : index
    %c0_3 = arith.constant 0 : index
    %1 = vector.load %arg3[%c0_1, %c0_2, %c0_3] : memref<1x36x256xf32, #tpu.memory_space<vmem>>, vector<1x36x256xf32>
    %2 = vector.shape_cast %1 : vector<1x36x256xf32> to vector<36x256xf32>
    %cst = arith.constant dense<0.000000e+00> : vector<8x256xf32>
    %3 = tpu.matmul %0, %2, %cst {dimension_numbers = #tpu.dot_dimension_numbers<[1], [0], [0], [1], [0, 0, 1, 1], [], []>} : vector<8x36xf32>, vector<36x256xf32>, vector<8x256xf32> -> vector<8x256xf32>
    %c0_4 = arith.constant 0 : index
    %c0_5 = arith.constant 0 : index
    %4 = vector.load %arg4[%c0_4, %c0_5] : memref<1x256xf32, #tpu.memory_space<vmem>>, vector<1x256xf32>
    %5 = vector.broadcast %4 : vector<1x256xf32> to vector<8x256xf32>
    %6 = arith.mulf %3, %5 : vector<8x256xf32>
    %c0_6 = arith.constant 0 : index
    %c0_7 = arith.constant 0 : index
    %c0_8 = arith.constant 0 : index
    %7 = vector.load %arg5[%c0_6, %c0_7, %c0_8] : memref<1x8x256xf32, #tpu.memory_space<vmem>>, vector<1x8x256xf32>
    %8 = vector.shape_cast %7 : vector<1x8x256xf32> to vector<8x256xf32>
    %9 = vector.shape_cast %6 : vector<8x256xf32> to vector<1x8x256xf32>
    tpu.vector_store %arg5[%c0_6, %c0_7, %c0_8], %9 {strides = array<i32>} : memref<1x8x256xf32, #tpu.memory_space<vmem>>, vector<1x8x256xf32>,
    return
  }
  func.func @transform_0(%arg0: i32, %arg1: i32) -> (i32, i32) {
    %c0_i32 = arith.constant 0 : i32
    %c0_i32_0 = arith.constant 0 : i32
    %c0_i32_1 = arith.constant 0 : i32
    return %c0_i32, %c0_i32_0 : i32, i32
  }
  func.func @transform_1(%arg0: i32, %arg1: i32) -> (i32, i32, i32) {
    %c0_i32 = arith.constant 0 : i32
    %c0_i32_0 = arith.constant 0 : i32
    return %arg0, %c0_i32, %arg1 : i32, i32, i32
  }
  func.func @transform_2(%arg0: i32, %arg1: i32) -> (i32, i32) {
    %c0_i32 = arith.constant 0 : i32
    %c0_i32_0 = arith.constant 0 : i32
    return %c0_i32, %arg1 : i32, i32
  }
  func.func @transform_3(%arg0: i32, %arg1: i32) -> (i32, i32, i32) {
    %c0_i32 = arith.constant 0 : i32
    %c0_i32_0 = arith.constant 0 : i32
    return %arg0, %c0_i32, %arg1 : i32, i32, i32
  }
}

</mosaic_0001>

<llo_original>
// kernel: tpu_custom_call.1
$region0: #{tpu_custom_call.1}
  #allocation0 [shape = 'u32[]', space=smem, size = 0x4, offset = 0x4, fixed_abs, tag = 'smem constant byte address 0x4 - core index']
  #allocation1 [shape = 'u32[144,128]{1,0:T(1,128)}', space=vmem, size = 0x12000, scoped, tag = 'internal scratch']
  %s0 = inlined_call_operand.vmem [shape: f32[8,36], index: 0, kind: input, shape index: {}]
  %s1 = inlined_call_operand.vmem [shape: f32[1,36,256], index: 1, kind: input, shape index: {}]
  %s2 = inlined_call_operand.vmem [shape: f32[1,256], index: 2, kind: input, shape index: {}]
  %s3 = inlined_call_operand.hbm [shape: f32[1,8,256], index: 3, kind: output, shape index: {}]
  %s4 = sld [smem:[#allocation0]]
  $region22: #{tpu_custom_call.1} parent=0
    _
  %s6 = ssub.s32 1, %s4
  %s7 = scalar_select 0, %s6, %s4
  $region1: #{tpu_custom_call.1} parent=0
    #allocation2 [shape = 'u8[8192]{0}', space=vmem, size = 0x2000, scoped, tag = 'output window, operand 0, single buffered']
    #allocation3 [shape = 's32[1]{0}', space=sflag, size = 0x4, scoped, tag = 'scoped memory for tpu_custom_call.1']
    %8 = vsyncpa [#allocation3], 0
    // Predicated region
    $region2: #{tpu_custom_call.1} parent=1 // pred_check
      _
    $region3: #{tpu_custom_call.1} parent=1 // pred_check_branch
      %10 = sbr.rel (0) target = $region5
    $region4: #{tpu_custom_call.1} parent=1 // pred_region
      _
    $region5: #{tpu_custom_call.1} parent=1 // pred_fallthru
      _
    // Predicated region
    $region6: #{tpu_custom_call.1} parent=1 // pred_check
      _
    $region7: #{tpu_custom_call.1} parent=1 // pred_check_branch
      %12 = sbr.rel (0) target = $region9
    $region8: #{tpu_custom_call.1} parent=1 // pred_region
      _
    $region9: #{tpu_custom_call.1} parent=1 // pred_fallthru
      _
    // Predicated region
    $region10: #{tpu_custom_call.1} parent=1 // pred_check
      _
    $region11: #{tpu_custom_call.1} parent=1 // pred_check_branch
      %14 = sbr.rel (0) target = $region13
    $region12: #{tpu_custom_call.1} parent=1 // pred_region
      _
    $region13: #{tpu_custom_call.1} parent=1 // pred_fallthru
      _
    %v15 = vld [vmem:[%s0] sm:$0xff]
    %v16 = vld [vmem:[%s1] sm:$0xff]
    %v17 = vld [vmem:[%s1 + $0x8] sm:$0xff]
    %v18 = vld [vmem:[%s1 + $0x10] sm:$0xff]
    %v19 = vld [vmem:[%s1 + $0x18] sm:$0xff]
    %v20 = vld [vmem:[%s1 + $0x20] sm:$0xff]
    %v21 = vld [vmem:[%s1 + $0x28] sm:$0xff]
    %v22 = vld [vmem:[%s1 + $0x30] sm:$0xff]
    %v23 = vld [vmem:[%s1 + $0x38] sm:$0xff]
    %v24 = vld [vmem:[%s1 + $0x40] sm:$0xf]
    %v25 = vld [vmem:[%s1 + $0x48] sm:$0xf]
    %vm26 = vcmask 293888
    %v28 = vsel %vm26, %v15, 0
    %vm30 = vcmask 1043456
    %v32 = vsel %vm30, %v24, 0
    %v35 = vsel %vm30, %v25, 0
    %37 = vmatprep.subr.mxu0 0.0
    %38 = vmatpush1.msra.mxu0 0.0
    %39 = vmatprep.subr.mxu0 0.0
    %40 = vmatpush1.msra.mxu0 0.0
    %41 = vmatprep.subr.mxu0 0.0
    %42 = vmatpush1.msra.mxu0 0.0
    %43 = vmatprep.subr.mxu0 0.0
    %44 = vmatpush1.msra.mxu0 0.0
    %45 = vmatprep.subr.mxu0 0.0
    %46 = vmatpush1.msra.mxu0 0.0
    %47 = vmatprep.subr.mxu0 0.0
    %48 = vmatpush1.msra.mxu0 0.0
    %49 = vmatprep.subr.mxu0 0.0
    %50 = vmatpush1.msra.mxu0 0.0
    %51 = vmatprep.subr.mxu0 0.0
    %52 = vmatpush1.msra.mxu0 0.0
    %53 = vmatprep.subr.mxu0 0.0
    %54 = vmatpush1.msra.mxu0 0.0
    %55 = vmatprep.subr.mxu0 0.0
    %56 = vmatpush1.msra.mxu0 0.0
    %57 = vmatprep.subr.mxu0 0.0
    %58 = vmatpush1.msra.mxu0 0.0
    %59 = vmatprep.subr.mxu0 %v35
    %60 = vmatpush1.msra.mxu0 %v32
    %61 = vmatprep.subr.mxu0 %v23
    %62 = vmatpush1.msra.mxu0 %v22
    %63 = vmatprep.subr.mxu0 %v21
    %64 = vmatpush1.msra.mxu0 %v20
    %65 = vmatprep.subr.mxu0 %v19
    %66 = vmatpush1.msra.mxu0 %v18
    %67 = vmatprep.subr.mxu0 %v17
    %68 = vmatpush1.msra.mxu0 %v16
    %69 = vmatprep.subr.mxu0 0.0
    %70 = vmatpush2.msra.mxu0 0.0
    %71 = vmatprep.subr.mxu0 0.0
    %72 = vmatpush2.msra.mxu0 0.0
    %73 = vmatprep.subr.mxu0 0.0
    %74 = vmatpush2.msra.mxu0 0.0
    %75 = vmatprep.subr.mxu0 0.0
    %76 = vmatpush2.msra.mxu0 0.0
    %77 = vmatprep.subr.mxu0 0.0
    %78 = vmatpush2.msra.mxu0 0.0
    %79 = vmatprep.subr.mxu0 0.0
    %80 = vmatpush2.msra.mxu0 0.0
    %81 = vmatprep.subr.mxu0 0.0
    %82 = vmatpush2.msra.mxu0 0.0
    %83 = vmatprep.subr.mxu0 0.0
    %84 = vmatpush2.msra.mxu0 0.0
    %85 = vmatprep.subr.mxu0 0.0
    %86 = vmatpush2.msra.mxu0 0.0
    %87 = vmatprep.subr.mxu0 0.0
    %88 = vmatpush2.msra.mxu0 0.0
    %89 = vmatprep.subr.mxu0 0.0
    %90 = vmatpush2.msra.mxu0 0.0
    %91 = vmatprep.subr.mxu0 0.0
    %92 = vmatpush2.msra.mxu0 0.0
    %93 = vmatprep.subr.mxu0 0.0
    %94 = vmatpush2.msra.mxu0 0.0
    %95 = vmatprep.subr.mxu0 0.0
    %96 = vmatpush2.msra.mxu0 0.0
    %97 = vmatprep.subr.mxu0 0.0
    %98 = vmatpush2.msra.mxu0 0.0
    %99 = vmatprep.subr.mxu0 0.0
    %100 = vmatpush2.msra.mxu0 0.0
    %101 = vmatprep.mubr.f32.mxu0 0.0
    %102 = vmatmul.mubr.f32.gmra.mxu0 %v28
    %v103 = vpop.f32.mrf.mxu0
    %v104 = vadd.f32 0.0, %v103
    %v105 = vpop.f32.mrf.mxu0
    %v106 = vadd.f32 0.0, %v105
    %107 = vdwg.mxu0
    %v108 = vld [vmem:[%s2] sm:$0x3]
    %v110 = vlaneseq
    %v111 = vshrl.u32 %v110, 7
    %v112 = vsub.s32 0, %v111
    %v113 = vrot.slane %v108, %v112
    %v114 = vlaneseq
    %v115 = vshrl.u32 %v114, 7
    %v116 = vsub.s32 1, %v115
    %v117 = vrot.slane %v108, %v116
    %v120 = vmul.f32 %v104, %v113
    %v121 = vmul.f32 %v106, %v117
    %122 = vst [vmem:[#allocation2] sm:$0xff] %v120
    %123 = vst [vmem:[#allocation2 + $0x8] sm:$0xff] %v121
    // Predicated region
    $region14: #{tpu_custom_call.1} parent=1 // pred_check
      _
    $region15: #{tpu_custom_call.1} parent=1 // pred_check_branch
      %125 = sbr.rel (0) target = $region17
    $region16: #{tpu_custom_call.1} parent=1 // pred_region
      %s127 = ssub.s32 256, 256
      %128 = vsyncadd [#allocation3], %s127
      %s130 = sshll.u32 [#allocation2], 4
      %s131 = int_to_ptr.vmem [resolvable:$true] %s130
      %133 = dma.vmem_to_hbm [thread:$0]  %s131, 256, %s3, [#allocation3]
    $region17: #{tpu_custom_call.1} parent=1 // pred_fallthru
      _
    // Predicated region
    $region18: #{tpu_custom_call.1} parent=1 // pred_check
      _
    $region19: #{tpu_custom_call.1} parent=1 // pred_check_branch
      %135 = sbr.rel (0) target = $region21
    $region20: #{tpu_custom_call.1} parent=1 // pred_region
      %136 = dma.done [#allocation3], 256
    $region21: #{tpu_custom_call.1} parent=1 // pred_fallthru
      _
    %137 = vsyncpa [#allocation3], 1

</llo_original>
